<compile_context>
chip_gen: v7x
topology: tpu7x:2x2x1
jax: 0.10.0
libtpu: 0.0.40
codegen_flags: <defaults>
</compile_context>

<pallas_src>
import functools

import jax
import jax.numpy as jnp
from jax.experimental import pallas as pl
from jax.experimental.pallas import tpu as pltpu


def _seg_ce_kernel(pred_ref, tgt_ref, out_ref, acc_ref, *,
                   ignore_index, hw, tile_hw, tiles_per_split, num_tiles, needs_tail):
    c = pl.program_id(1)            # pixel-axis core split (megacore)
    i = pl.program_id(2)            # pixel-tile index within the split (reduction axis)
    g = c * tiles_per_split + i     # global pixel-tile index

    @pl.when(i == 0)
    def _():
        acc_ref[...] = jnp.zeros_like(acc_ref)

    logits = pred_ref[0].astype(jnp.float32)     # (C, tile_hw): classes on sublanes
    tgt = tgt_ref[0]                             # (1, tile_hw) int32

    # numerically-stable log-sum-exp over classes (sublane reductions)
    m = jnp.max(logits, axis=0, keepdims=True)                               # (1, tile_hw)
    lse = m + jnp.log(jnp.sum(jnp.exp(logits - m), axis=0, keepdims=True))   # (1, tile_hw)

    # logit at the target class via one-hot compare; (C,1) iota broadcasts over lanes
    # (avoids materializing a full (C, tile_hw) int32 iota temporary)
    cls = jax.lax.broadcasted_iota(jnp.int32, (logits.shape[0], 1), 0)       # (C, 1)
    logit_t = jnp.sum(jnp.where(cls == tgt, logits, 0.0), axis=0, keepdims=True)

    # per-pixel loss, zero at ignore_index.  Keep the select (NOT a multiply) so NaN/Inf
    # from padded lanes can never leak into the accumulator.
    loss = jnp.where(tgt != ignore_index, lse - logit_t, 0.0)                # (1, tile_hw)

    if needs_tail:
        # Only the globally-last (possibly ragged) tile and overshoot tiles of the pixel
        # split pay for the per-lane bounds mask; the common path is a single VPU add.
        @pl.when(g < num_tiles - 1)
        def _():
            acc_ref[...] += loss

        @pl.when(g >= num_tiles - 1)
        def _():
            lane = jax.lax.broadcasted_iota(jnp.int32, loss.shape, 1)
            acc_ref[...] += jnp.where(lane < hw - g * tile_hw, loss, 0.0)
    else:
        acc_ref[...] += loss

    @pl.when(i == tiles_per_split - 1)
    def _():
        s = jnp.sum(acc_ref[...], axis=1, keepdims=True)                     # (1, 1)
        out_ref[0, 0] = jnp.broadcast_to(s, (8, 128))


def _vmem_budget():
    """Generation-aware scoped-VMEM limit and usable per-step byte budget."""
    try:
        cap = int(pltpu.get_tpu_info().vmem_capacity_bytes)
    except Exception:
        cap = 64 * 1024 * 1024          # conservative: v7x per-TensorCore VMEM
    limit = min((cap * 3) // 4, 96 * 1024 * 1024)   # 48 MiB on v7x, 96 MiB on v5e/v6e
    budget = (limit * 4) // 5                        # headroom for compiler scratch
    return int(limit), int(budget)


def _auto_tile_hw(num_classes, hw, in_bytes, budget_bytes):
    """Largest pixel tile whose full VMEM footprint fits the budget."""
    c = max(int(num_classes), 1)
    per_px = (2 * c * in_bytes   # pred double-buffer (HBM->VMEM DMA)
              + 4 * c * 4        # ~4 full-size f32 temporaries (upcast / sub / exp / select)
              + 2 * 8 * 4        # target int32 double-buffer (1-row block pads to 8 sublanes)
              + 8 * 4            # (1, tile) f32 accumulator (pads to 8 sublanes)
              + 8 * 4)           # slack for (1, tile) f32 intermediates
    t = max(budget_bytes // per_px, 128)
    t = min(t, 256 * 1024)       # diminishing returns; bounds ragged-tile waste
    if hw <= t:
        return hw                # single full-extent pixel tile (any size allowed)
    return (t // 128) * 128


def seg_cross_entropy_loss(pred_nchw, target, *, ignore_index=255, tile_hw=None):
    """pred_nchw: (N, C, H, W) float logits (f32 or bf16); target: (N, H, W) int labels."""
    N, C, H, W = pred_nchw.shape
    HW = H * W
    total = N * HW
    in_bytes = jnp.dtype(pred_nchw.dtype).itemsize

    vmem_limit, vmem_budget = _vmem_budget()
    if tile_hw is None:
        tile_hw = _auto_tile_hw(C, HW, in_bytes, vmem_budget)
    else:
        tile_hw = min(int(tile_hw), HW)
        if tile_hw < HW:
            tile_hw = max(128, (tile_hw // 128) * 128)

    num_tiles = (HW + tile_hw - 1) // tile_hw

    # Split the pixel-tile axis across the two v7x TensorCores when the batch axis alone
    # cannot keep both busy (batch-1 inference).  On single-TC v5e/v6e the extra parallel
    # axis is just a loop; only allow it when duplicate-tile waste is small.
    split_px = (N == 1) and (num_tiles >= 2) and (num_tiles % 2 == 0 or num_tiles >= 8)
    splits = 2 if split_px else 1
    tiles_per_split = (num_tiles + splits - 1) // splits
    overshoot = splits * tiles_per_split != num_tiles
    needs_tail = (HW % tile_hw != 0) or overshoot

    last_block = num_tiles - 1

    def _blk(c, i):
        g = c * tiles_per_split + i
        return jnp.minimum(g, last_block) if overshoot else g

    # layout-preserving reshapes only (no transpose, no pad, no extra HBM pass)
    x = pred_nchw.reshape(N, C, HW)
    t = target.reshape(N, 1, HW).astype(jnp.int32)

    kernel = functools.partial(
        _seg_ce_kernel, ignore_index=ignore_index, hw=HW, tile_hw=tile_hw,
        tiles_per_split=tiles_per_split, num_tiles=num_tiles, needs_tail=needs_tail)

    cost = pl.CostEstimate(
        flops=6 * N * C * HW,
        transcendentals=N * C * HW + N * HW,
        bytes_accessed=N * C * HW * in_bytes + N * HW * 4 + N * splits * 8 * 128 * 4)

    partial = pl.pallas_call(
        kernel,
        out_shape=jax.ShapeDtypeStruct((N, splits, 8, 128), jnp.float32),
        grid=(N, splits, tiles_per_split),
        in_specs=[
            pl.BlockSpec((1, C, tile_hw), lambda n, c, i: (n, 0, _blk(c, i))),
            pl.BlockSpec((1, 1, tile_hw), lambda n, c, i: (n, 0, _blk(c, i))),
        ],
        out_specs=pl.BlockSpec((1, 1, 8, 128), lambda n, c, i: (n, c, 0, 0)),
        scratch_shapes=[pltpu.VMEM((1, tile_hw), jnp.float32)],
        compiler_params=pltpu.CompilerParams(
            dimension_semantics=("parallel", "parallel", "arbitrary"),
            vmem_limit_bytes=vmem_limit),
        cost_estimate=cost,
    )(x, t)

    return jnp.sum(partial[:, :, 0, 0]) / jnp.float32(total)


def _reference(pred_nchw, target, ignore_index=255):
    # pure-JAX reference of CrossEntropyLoss(ignore_index, reduction='none').mean()
    N, C, H, W = pred_nchw.shape
    x = jnp.transpose(pred_nchw, (0, 2, 3, 1)).reshape(-1, C).astype(jnp.float32)
    t = target.reshape(-1).astype(jnp.int32)
    lse = jax.nn.logsumexp(x, axis=-1)
    safe_t = jnp.where(t == ignore_index, 0, t)
    logit_t = jnp.take_along_axis(x, safe_t[:, None], axis=-1)[:, 0]
    loss = jnp.where(t == ignore_index, 0.0, lse - logit_t)
    return jnp.mean(loss)


if __name__ == "__main__":
    key = jax.random.PRNGKey(0)
    k1, k2, k3 = jax.random.split(key, 3)

    # 1) default auto-tiled path
    N, C, H, W = 2, 8, 16, 16
    pred = jax.random.normal(k1, (N, C, H, W), dtype=jnp.float32)
    target = jax.random.randint(k2, (N, H, W), 0, C, dtype=jnp.int32)
    target = jnp.where(jax.random.bernoulli(k3, 0.1, (N, H, W)), 255, target)

    loss = seg_cross_entropy_loss(pred, target)
    jax.block_until_ready(loss)
    ref = _reference(pred, target)
    assert jnp.allclose(loss, ref, atol=1e-5, rtol=1e-5), (loss, ref)

    # 2) forced multi-tile reduction path
    loss2 = seg_cross_entropy_loss(pred, target, tile_hw=128)
    jax.block_until_ready(loss2)
    assert jnp.allclose(loss2, ref, atol=1e-5, rtol=1e-5), (loss2, ref)

    # 3) batch-1 + ragged last tile + pixel-axis core split
    k4, k5, k6 = jax.random.split(jax.random.PRNGKey(1), 3)
    N2, H2, W2 = 1, 20, 20
    pred2 = jax.random.normal(k4, (N2, C, H2, W2), dtype=jnp.float32)
    target2 = jax.random.randint(k5, (N2, H2, W2), 0, C, dtype=jnp.int32)
    target2 = jnp.where(jax.random.bernoulli(k6, 0.1, (N2, H2, W2)), 255, target2)
    loss3 = seg_cross_entropy_loss(pred2, target2, tile_hw=128)
    jax.block_until_ready(loss3)
    ref3 = _reference(pred2, target2)
    assert jnp.allclose(loss3, ref3, atol=1e-5, rtol=1e-5), (loss3, ref3)

    # 4) bf16 fast path (halves the dominant HBM stream; LSE math still f32 in-kernel)
    loss4 = seg_cross_entropy_loss(pred.astype(jnp.bfloat16), target)
    jax.block_until_ready(loss4)
    ref4 = _reference(pred.astype(jnp.bfloat16), target)
    assert jnp.allclose(loss4, ref4, atol=5e-2, rtol=5e-2), (loss4, ref4)

    print("KERNEL_OK")
</pallas_src>

<mosaic_0001>
module attributes {stable_mosaic.version = 11 : i64} {
  func.func @_seg_ce_kernel(%arg0: i32, %arg1: i32, %arg2: i32, %arg3: memref<1x8x256xf32, #tpu.memory_space<vmem>>, %arg4: memref<1x1x256xi32, #tpu.memory_space<vmem>>, %arg5: memref<1x1x8x128xf32, #tpu.memory_space<vmem>>, %arg6: memref<1x256xf32, #tpu.memory_space<vmem>>) attributes {dimension_semantics = [#tpu.dimension_semantics<parallel>, #tpu.dimension_semantics<parallel>, #tpu.dimension_semantics<arbitrary>], iteration_bounds = array<i64: 2, 1, 1>, scalar_prefetch = 0 : i64, scratch_operands = 1 : i64, tpu.core_type = #tpu.core_type<tc>, window_params = [{transform_indices = @transform_0, window_bounds = array<i64: 1, 8, 256>}, {transform_indices = @transform_1, window_bounds = array<i64: 1, 1, 256>}, {transform_indices = @transform_2, window_bounds = array<i64: 1, 1, 8, 128>}]} {
    %c0_i32 = arith.constant 0 : i32
    %0 = arith.cmpi eq, %arg2, %c0_i32 : i32
    %1 = arith.extui %0 : i1 to i32
    %c0_i32_0 = arith.constant 0 : i32
    %2 = arith.cmpi ne, %1, %c0_i32_0 : i32
    scf.if %2 {
      %cst_16 = arith.constant 0.000000e+00 : f32
      %35 = vector.broadcast %cst_16 : f32 to vector<1x256xf32>
      %c0_17 = arith.constant 0 : index
      %c0_18 = arith.constant 0 : index
      %36 = vector.load %arg6[%c0_17, %c0_18] : memref<1x256xf32, #tpu.memory_space<vmem>>, vector<1x256xf32>
      tpu.vector_store %arg6[%c0_17, %c0_18], %35 {strides = array<i32>} : memref<1x256xf32, #tpu.memory_space<vmem>>, vector<1x256xf32>,
    } else {
    }
    %c0 = arith.constant 0 : index
    %c0_1 = arith.constant 0 : index
    %c0_2 = arith.constant 0 : index
    %3 = vector.load %arg3[%c0, %c0_1, %c0_2] : memref<1x8x256xf32, #tpu.memory_space<vmem>>, vector<1x8x256xf32>
    %4 = vector.shape_cast %3 : vector<1x8x256xf32> to vector<8x256xf32>
    %c0_3 = arith.constant 0 : index
    %c0_4 = arith.constant 0 : index
    %c0_5 = arith.constant 0 : index
    %5 = vector.load %arg4[%c0_3, %c0_4, %c0_5] : memref<1x1x256xi32, #tpu.memory_space<vmem>>, vector<1x1x256xi32>
    %6 = vector.shape_cast %5 : vector<1x1x256xi32> to vector<1x256xi32>
    %cst = arith.constant dense<0xFF800000> : vector<256xf32>
    %7 = vector.multi_reduction <maximumf>, %4, %cst [0] : vector<8x256xf32> to vector<256xf32>
    %8 = vector.shape_cast %7 : vector<256xf32> to vector<1x256xf32>
    %9 = vector.broadcast %8 : vector<1x256xf32> to vector<8x256xf32>
    %10 = arith.subf %4, %9 : vector<8x256xf32>
    %11 = math.exp %10 : vector<8x256xf32>
    %cst_6 = arith.constant dense<0.000000e+00> : vector<256xf32>
    %12 = vector.multi_reduction <add>, %11, %cst_6 [0] : vector<8x256xf32> to vector<256xf32>
    %13 = vector.shape_cast %12 : vector<256xf32> to vector<1x256xf32>
    %14 = math.log %13 : vector<1x256xf32>
    %15 = arith.addf %8, %14 : vector<1x256xf32>
    %16 = tpu.iota {dimensions = array<i32: 0>} : vector<8x1xi32>
    %17 = vector.broadcast %16 : vector<8x1xi32> to vector<8x256xi32>
    %18 = vector.broadcast %6 : vector<1x256xi32> to vector<8x256xi32>
    %19 = arith.cmpi eq, %17, %18 : vector<8x256xi32>
    %cst_7 = arith.constant 0.000000e+00 : f32
    %20 = vector.broadcast %cst_7 : f32 to vector<8x256xf32>
    %21 = arith.select %19, %4, %20 : vector<8x256xi1>, vector<8x256xf32>
    %cst_8 = arith.constant dense<0.000000e+00> : vector<256xf32>
    %22 = vector.multi_reduction <add>, %21, %cst_8 [0] : vector<8x256xf32> to vector<256xf32>
    %23 = vector.shape_cast %22 : vector<256xf32> to vector<1x256xf32>
    %c255_i32 = arith.constant 255 : i32
    %24 = vector.broadcast %c255_i32 : i32 to vector<1x256xi32>
    %25 = arith.cmpi ne, %6, %24 : vector<1x256xi32>
    %26 = arith.subf %15, %23 : vector<1x256xf32>
    %cst_9 = arith.constant 0.000000e+00 : f32
    %27 = vector.broadcast %cst_9 : f32 to vector<1x256xf32>
    %28 = arith.select %25, %26, %27 : vector<1x256xi1>, vector<1x256xf32>
    %c0_10 = arith.constant 0 : index
    %c0_11 = arith.constant 0 : index
    %29 = vector.load %arg6[%c0_10, %c0_11] : memref<1x256xf32, #tpu.memory_space<vmem>>, vector<1x256xf32>
    %30 = arith.addf %29, %28 : vector<1x256xf32>
    %c0_12 = arith.constant 0 : index
    %c0_13 = arith.constant 0 : index
    %31 = vector.load %arg6[%c0_12, %c0_13] : memref<1x256xf32, #tpu.memory_space<vmem>>, vector<1x256xf32>
    tpu.vector_store %arg6[%c0_12, %c0_13], %30 {strides = array<i32>} : memref<1x256xf32, #tpu.memory_space<vmem>>, vector<1x256xf32>,
    %c0_i32_14 = arith.constant 0 : i32
    %32 = arith.cmpi eq, %arg2, %c0_i32_14 : i32
    %33 = arith.extui %32 : i1 to i32
    %c0_i32_15 = arith.constant 0 : i32
    %34 = arith.cmpi ne, %33, %c0_i32_15 : i32
    scf.if %34 {
      %c0_16 = arith.constant 0 : index
      %c0_17 = arith.constant 0 : index
      %35 = vector.load %arg6[%c0_16, %c0_17] : memref<1x256xf32, #tpu.memory_space<vmem>>, vector<1x256xf32>
      %cst_18 = arith.constant dense<0.000000e+00> : vector<1xf32>
      %36 = vector.multi_reduction <add>, %35, %cst_18 [1] : vector<1x256xf32> to vector<1xf32>
      %37 = vector.shape_cast %36 : vector<1xf32> to vector<1x1xf32>
      %38 = vector.shape_cast %37 : vector<1x1xf32> to vector<1x1xf32>
      %39 = vector.broadcast %38 : vector<1x1xf32> to vector<8x128xf32>
      %c0_19 = arith.constant 0 : index
      %c0_20 = arith.constant 0 : index
      %c0_21 = arith.constant 0 : index
      %c0_22 = arith.constant 0 : index
      %40 = vector.load %arg5[%c0_19, %c0_20, %c0_21, %c0_22] : memref<1x1x8x128xf32, #tpu.memory_space<vmem>>, vector<1x1x8x128xf32>
      %41 = vector.shape_cast %40 : vector<1x1x8x128xf32> to vector<8x128xf32>
      %42 = vector.shape_cast %39 : vector<8x128xf32> to vector<1x1x8x128xf32>
      tpu.vector_store %arg5[%c0_19, %c0_20, %c0_21, %c0_22], %42 {strides = array<i32>} : memref<1x1x8x128xf32, #tpu.memory_space<vmem>>, vector<1x1x8x128xf32>,
    } else {
    }
    return
  }
  func.func @transform_0(%arg0: i32, %arg1: i32, %arg2: i32) -> (i32, i32, i32) {
    %c1_i32 = arith.constant 1 : i32
    %0 = arith.muli %arg1, %c1_i32 : i32
    %1 = arith.addi %0, %arg2 : i32
    %c0_i32 = arith.constant 0 : i32
    %c0_i32_0 = arith.constant 0 : i32
    return %arg0, %c0_i32, %1 : i32, i32, i32
  }
  func.func @transform_1(%arg0: i32, %arg1: i32, %arg2: i32) -> (i32, i32, i32) {
    %c1_i32 = arith.constant 1 : i32
    %0 = arith.muli %arg1, %c1_i32 : i32
    %1 = arith.addi %0, %arg2 : i32
    %c0_i32 = arith.constant 0 : i32
    %c0_i32_0 = arith.constant 0 : i32
    return %arg0, %c0_i32, %1 : i32, i32, i32
  }
  func.func @transform_2(%arg0: i32, %arg1: i32, %arg2: i32) -> (i32, i32, i32, i32) {
    %c0_i32 = arith.constant 0 : i32
    %c0_i32_0 = arith.constant 0 : i32
    %c0_i32_1 = arith.constant 0 : i32
    return %arg0, %arg1, %c0_i32, %c0_i32_0 : i32, i32, i32, i32
  }
}

</mosaic_0001>

<llo_original>
// kernel: tpu_custom_call.1
$region0: #{tpu_custom_call.1}
  #allocation0 [shape = 'u32[]', space=smem, size = 0x4, offset = 0x4, fixed_abs, tag = 'smem constant byte address 0x4 - core index']
  #allocation1 [shape = 'u32[144,128]{1,0:T(1,128)}', space=vmem, size = 0x12000, scoped, tag = 'internal scratch']
  #allocation2 [shape = 'f32[1,256]{1,0:T(1,128)}', space=vmem, size = 0x400, scoped, tag = 'scratch operand']
  %s0 = inlined_call_operand.hbm [shape: f32[2,8,256], index: 0, kind: input, shape index: {}]
  %s1 = inlined_call_operand.hbm [shape: s32[2,1,256], index: 1, kind: input, shape index: {}]
  %s2 = inlined_call_operand.hbm [shape: f32[2,1,8,128], index: 2, kind: output, shape index: {}]
  %s3 = sld [smem:[#allocation0]]
  $region57: #{tpu_custom_call.1} parent=0
    _
  %s5 = ssub.s32 1, %s3
  %s6 = scalar_select 0, %s5, %s3
  $region1: #{tpu_custom_call.1} parent=0
    #allocation3 [shape = 'u8[16384]{0}', space=vmem, size = 0x4000, scoped, tag = 'input window, operand 0']
    #allocation4 [shape = 's32[2]{0}', space=sflag, size = 0x8, scoped, tag = 'scoped memory for tpu_custom_call.1']
    #allocation5 [shape = 's32[2]{0}', space=sflag, size = 0x8, scoped, tag = 'scoped memory for tpu_custom_call.1']
    #allocation6 [shape = 'u8[2048]{0}', space=vmem, size = 0x800, scoped, tag = 'input window, operand 1']
    #allocation7 [shape = 's32[2]{0}', space=sflag, size = 0x8, scoped, tag = 'scoped memory for tpu_custom_call.1']
    #allocation8 [shape = 'u8[8192]{0}', space=vmem, size = 0x2000, scoped, tag = 'output window, operand 0']
    %7 = vsyncpa [#allocation4], 0
    %s8 = scalar_lea.sflag [#allocation4], 1
    %9 = vsyncpa %s8, 0
    %10 = vsyncpa [#allocation7], 0
    %s11 = scalar_lea.sflag [#allocation7], 1
    %12 = vsyncpa %s11, 0
    %13 = vsyncpa [#allocation5], 0
    %s14 = scalar_lea.sflag [#allocation5], 1
    %15 = vsyncpa %s14, 0
    loop: start=0, step=1, limit=4
    $region2: #{tpu_custom_call.1} parent=1 // loop_pre_header
      _
    $region3: #{tpu_custom_call.1} parent=1 // loop_header
      %s17 = sphi 0, %s21
      %p18 = scmp.ge.s32.totalorder %s17, 4
      %s24 = sphi 0, %s43
      %s25 = sphi 0, %s39
      %s26 = sphi 0, %s35
      %s27 = sphi 0, %s24
      %s28 = sphi 0, %s25
      %s29 = sphi 0, %s26
      %s30 = sphi 0, %s27
      %s31 = sphi 0, %s28
      %s32 = sphi 0, %s29
      %s50 = sphi 0, %s52
      %s53 = sphi 0, %s50
      %s54 = sphi 0, %s53
      %s70 = sphi 0, %s54
      %s80 = sphi 0, %s82
      %s83 = sphi 0, %s80
      %s84 = sphi 0, %s83
      %s100 = sphi 0, %s84
      %s108 = sphi 0, %s110
      %s111 = sphi 0, %s108
      %s112 = sphi 0, %s111
      %s128 = sphi 0, %s112
    $region4: #{tpu_custom_call.1} parent=1 // loop_header_branch
      %20 = sbr.rel (%p18) target = $region8
    $region5: #{tpu_custom_call.1} parent=1 // loop_body
      %s22 = ssub.s32 %s17, 1
      %s23 = ssub.s32 %s17, 2
      %s33 = sadd.s32 1, %s26
      %p34 = scmp.ge.s32.totalorder %s33, 1
      %s35 = scalar_select %p34, 0, %s33
      %s36 = sadd.s32 1, %s25
      %s37 = scalar_select %p34, %s36, %s25
      %p38 = scmp.ge.s32.totalorder %s37, 1
      %s39 = scalar_select %p38, 0, %s37
      %s40 = sadd.s32 1, %s24
      %s41 = scalar_select %p38, %s40, %s24
      %p42 = scmp.ge.s32.totalorder %s41, 2
      %s43 = scalar_select %p42, 0, %s41
      %s44 = sadd.s32 %s25, %s26
      %s45 = sadd.s32 %s39, %s35
      %s46 = ssub.s32 %s24, %s43
      %s47 = ssub.s32 %s44, %s45
      %s48 = sor.u32 %s46, %s47
      %p49 = scmp.eq.s32.totalorder %s48, 0
      %s51 = sadd.s32 %s50, 1
      %s52 = scalar_select %p49, %s50, %s51
      %p55 = pneg %p49
      %p56 = scmp.eq.s32.totalorder %s17, 1
      %p57 = por %p55, %p56
      %p58 = scmp.ne.s32.totalorder %s50, %s53
      %p59 = scmp.eq.s32.totalorder %s17, 0
      %p60 = por %p58, %p59
      %p61 = scmp.ne.s32.totalorder %s50, %s53
      %p62 = scmp.eq.s32.totalorder %s22, 1
      %p63 = por %p61, %p62
      %p64 = scmp.ne.s32.totalorder %s53, %s54
      %p65 = scmp.eq.s32.totalorder %s22, 0
      %p66 = por %p64, %p65
      %p67 = scmp.ne.s32.totalorder %s53, %s54
      %p68 = scmp.eq.s32.totalorder %s23, 1
      %p69 = por %p67, %p68
      %p71 = scmp.ne.s32.totalorder %s54, %s70
      %p72 = scmp.eq.s32.totalorder %s23, 0
      %p73 = por %p71, %p72
      %s74 = sadd.s32 %s25, %s26
      %s75 = sadd.s32 %s39, %s35
      %s76 = ssub.s32 %s24, %s43
      %s77 = ssub.s32 %s74, %s75
      %s78 = sor.u32 %s76, %s77
      %p79 = scmp.eq.s32.totalorder %s78, 0
      %s81 = sadd.s32 %s80, 1
      %s82 = scalar_select %p79, %s80, %s81
      %p85 = pneg %p79
      %p86 = scmp.eq.s32.totalorder %s17, 1
      %p87 = por %p85, %p86
      %p88 = scmp.ne.s32.totalorder %s80, %s83
      %p89 = scmp.eq.s32.totalorder %s17, 0
      %p90 = por %p88, %p89
      %p91 = scmp.ne.s32.totalorder %s80, %s83
      %p92 = scmp.eq.s32.totalorder %s22, 1
      %p93 = por %p91, %p92
      %p94 = scmp.ne.s32.totalorder %s83, %s84
      %p95 = scmp.eq.s32.totalorder %s22, 0
      %p96 = por %p94, %p95
      %p97 = scmp.ne.s32.totalorder %s83, %s84
      %p98 = scmp.eq.s32.totalorder %s23, 1
      %p99 = por %p97, %p98
      %p101 = scmp.ne.s32.totalorder %s84, %s100
      %p102 = scmp.eq.s32.totalorder %s23, 0
      %p103 = por %p101, %p102
      %s104 = ssub.s32 %s24, %s43
      %s105 = ssub.s32 %s25, %s39
      %s106 = sor.u32 %s104, %s105
      %p107 = scmp.eq.s32.totalorder %s106, 0
      %s109 = sadd.s32 %s108, 1
      %s110 = scalar_select %p107, %s108, %s109
      %p113 = pneg %p107
      %p114 = scmp.eq.s32.totalorder %s17, 1
      %p115 = por %p113, %p114
      %p116 = scmp.ne.s32.totalorder %s108, %s111
      %p117 = scmp.eq.s32.totalorder %s17, 0
      %p118 = por %p116, %p117
      %p119 = scmp.ne.s32.totalorder %s108, %s111
      %p120 = scmp.eq.s32.totalorder %s22, 1
      %p121 = por %p119, %p120
      %p122 = scmp.ne.s32.totalorder %s111, %s112
      %p123 = scmp.eq.s32.totalorder %s22, 0
      %p124 = por %p122, %p123
      %p125 = scmp.ne.s32.totalorder %s111, %s112
      %p126 = scmp.eq.s32.totalorder %s23, 1
      %p127 = por %p125, %p126
      %p129 = scmp.ne.s32.totalorder %s112, %s128
      %p130 = scmp.eq.s32.totalorder %s23, 0
      %p131 = por %p129, %p130
      %p132 = scmp.le.s32.totalorder 1, %s17
      %p133 = scmp.lt.s32.totalorder %s17, 3
      %p134 = pnand %p132, %p133
      %p135 = pneg %p134
      // Predicated region
      $region9: #{tpu_custom_call.1} parent=5 // pred_check
        _
      $region10: #{tpu_custom_call.1} parent=5 // pred_check_branch
        %137 = sbr.rel (%p134) target = $region12
      $region11: #{tpu_custom_call.1} parent=5 // pred_region
        %s138 = ssub.s32 %s17, 1
      $region12: #{tpu_custom_call.1} parent=5 // pred_fallthru
        _
      %p139 = scmp.lt.s32.totalorder %s17, 2
      // Predicated region
      $region13: #{tpu_custom_call.1} parent=5 // pred_check
        %p140 = pneg %p139
      $region14: #{tpu_custom_call.1} parent=5 // pred_check_branch
        %142 = sbr.rel (%p140) target = $region16
      $region15: #{tpu_custom_call.1} parent=5 // pred_region
        // Predicated region
        $region17: #{tpu_custom_call.1} parent=15 // pred_check
          %p143 = pneg %p60
        $region18: #{tpu_custom_call.1} parent=15 // pred_check_branch
          %145 = sbr.rel (%p143) target = $region20
        $region19: #{tpu_custom_call.1} parent=15 // pred_region
          %s146 = sand.u32 %s50, 1
          %s147 = scalar_lea.sflag [#allocation4], %s146
          %s148 = sand.u32 %s50, 1
          %s149 = smul.addr %s148, 16
          %s150 = scalar_lea.vmem [#allocation3], %s149
          %s151 = sadd.s32 %s25, %s26
          %s152 = smul.u32 2, %s151
          %s154 = ssub.s32 256, 256
          %155 = vsyncadd %s147, %s154
          %s156 = smul.addr %s24, 2
          %s157 = sadd.s32 %s152, %s156
          %s158 = smul.addr %s157, 128
          %s159 = scalar_lea.hbm %s0, %s158
          %s161 = sshll.u32 %s150, 4
          %s162 = int_to_ptr.vmem [resolvable:$true] %s161
          %164 = dma.hbm_to_vmem [thread:$0]  %s159, 256, %s162, %s147
        $region20: #{tpu_custom_call.1} parent=15 // pred_fallthru
          _
        // Predicated region
        $region21: #{tpu_custom_call.1} parent=15 // pred_check
          %p165 = pneg %p90
        $region22: #{tpu_custom_call.1} parent=15 // pred_check_branch
          %167 = sbr.rel (%p165) target = $region24
        $region23: #{tpu_custom_call.1} parent=15 // pred_region
          %s168 = sand.u32 %s80, 1
          %s169 = scalar_lea.sflag [#allocation7], %s168
          %s170 = sand.u32 %s80, 1
          %s171 = smul.addr %s170, 2
          %s172 = scalar_lea.vmem [#allocation6], %s171
          %s173 = sadd.s32 %s25, %s26
          %s174 = smul.u32 2, %s173
          %s176 = ssub.s32 32, 32
          %177 = vsyncadd %s169, %s176
          %s178 = smul.addr %s24, 2
          %s179 = sadd.s32 %s174, %s178
          %s180 = smul.addr %s179, 16
          %s181 = scalar_lea.hbm %s1, %s180
          %s183 = sshll.u32 %s172, 4
          %s184 = int_to_ptr.vmem [resolvable:$true] %s183
          %186 = dma.hbm_to_vmem [thread:$0]  %s181, 32, %s184, %s169
        $region24: #{tpu_custom_call.1} parent=15 // pred_fallthru
          _
      $region16: #{tpu_custom_call.1} parent=5 // pred_fallthru
        _
      %p187 = scmp.le.s32.totalorder 1, %s17
      %p188 = scmp.lt.s32.totalorder %s17, 3
      %p189 = pnand %p187, %p188
      %p190 = pneg %p189
      // Predicated region
      $region25: #{tpu_custom_call.1} parent=5 // pred_check
        _
      $region26: #{tpu_custom_call.1} parent=5 // pred_check_branch
        %192 = sbr.rel (%p189) target = $region28
      $region27: #{tpu_custom_call.1} parent=5 // pred_region
        %s193 = ssub.s32 %s17, 1
        %s194 = sand.u32 %s53, 1
        %s195 = scalar_lea.sflag [#allocation4], %s194
        %s196 = sand.u32 %s53, 1
        %s197 = smul.addr %s196, 16
        %s198 = scalar_lea.vmem [#allocation3], %s197
        // Predicated region
        $region29: #{tpu_custom_call.1} parent=27 // pred_check
          %p199 = pneg %p66
        $region30: #{tpu_custom_call.1} parent=27 // pred_check_branch
          %201 = sbr.rel (%p199) target = $region32
        $region31: #{tpu_custom_call.1} parent=27 // pred_region
          %202 = dma.done %s195, 256
        $region32: #{tpu_custom_call.1} parent=27 // pred_fallthru
          _
        %s203 = sand.u32 %s83, 1
        %s204 = scalar_lea.sflag [#allocation7], %s203
        %s205 = sand.u32 %s83, 1
        %s206 = smul.addr %s205, 2
        %s207 = scalar_lea.vmem [#allocation6], %s206
        // Predicated region
        $region33: #{tpu_custom_call.1} parent=27 // pred_check
          %p208 = pneg %p96
        $region34: #{tpu_custom_call.1} parent=27 // pred_check_branch
          %210 = sbr.rel (%p208) target = $region36
        $region35: #{tpu_custom_call.1} parent=27 // pred_region
          %211 = dma.done %s204, 32
        $region36: #{tpu_custom_call.1} parent=27 // pred_fallthru
          _
        %s212 = sand.u32 %s53, 1
        %s213 = scalar_lea.sflag [#allocation4], %s212
        %s214 = sand.u32 %s53, 1
        %s215 = smul.addr %s214, 16
        %s216 = scalar_lea.vmem [#allocation3], %s215
        %p217 = pneg %p66
        %p218 = pneg %p63
        %s219 = sand.u32 %s83, 1
        %s220 = scalar_lea.sflag [#allocation7], %s219
        %s221 = sand.u32 %s83, 1
        %s222 = smul.addr %s221, 2
        %s223 = scalar_lea.vmem [#allocation6], %s222
        %p224 = pneg %p96
        %p225 = pneg %p93
        %p226 = pneg %p124
        %p227 = pneg %p121
        %s228 = sand.u32 %s111, 1
        %s229 = scalar_lea.sflag [#allocation5], %s228
        %s230 = sand.u32 %s111, 1
        %s231 = smul.addr %s230, 8
        %s232 = scalar_lea.vmem [#allocation8], %s231
        %s233 = sadd.s32 %s28, %s29
        %s234 = smul.u32 2, %s233
        %s235 = sadd.s32 %s28, %s29
        %s236 = smul.u32 2, %s235
        %p237 = scmp.eq.s32.totalorder %s29, 0
        // Predicated region
        $region37: #{tpu_custom_call.1} parent=27 // pred_check
          %p238 = pneg %p237
        $region38: #{tpu_custom_call.1} parent=27 // pred_check_branch
          %240 = sbr.rel (%p238) target = $region40
        $region39: #{tpu_custom_call.1} parent=27 // pred_region
          %v241 = vlaneseq
          %vm242 = vcmp.ge.s32.totalorder %v241, 0
          %vm243 = vcmp.lt.s32.totalorder %v241, 256
          %vm244 = vmand %vm242, %vm243
          %245 = vst.msk [vmem:[#allocation2] sm:$0x3] %vm244, 0.0
        $region40: #{tpu_custom_call.1} parent=27 // pred_fallthru
          _
        %v246 = vld [vmem:[%s198] sm:$0xff]
        %v247 = vld [vmem:[%s198 + $0x8] sm:$0xff]
        %v248 = vld [vmem:[%s207] sm:$0x3]
        %v249 = vrot.slane %v246, 4
        %v250 = vmax.f32 %v246, %v249
        %v251 = vrot.slane %v250, 2
        %v252 = vmax.f32 %v250, %v251
        %v253 = vrot.slane %v252, 1
        %v254 = vmax.f32 %v252, %v253
        %v255 = vrot.slane %v247, 4
        %v256 = vmax.f32 %v247, %v255
        %v257 = vrot.slane %v256, 2
        %v258 = vmax.f32 %v256, %v257
        %v259 = vrot.slane %v258, 1
        %v260 = vmax.f32 %v258, %v259
        %v261 = vsub.f32 %v246, %v254
        %v262 = vsub.f32 %v247, %v260
        %v263 = vmul.f32 %v261, 1.442695
        %v264 = vpow.pop %v263
        %v265 = vmul.f32 %v262, 1.442695
        %v266 = vpow.pop %v265
        %v267 = vrot.slane %v264, 4
        %v268 = vadd.f32 %v264, %v267
        %v269 = vrot.slane %v268, 2
        %v270 = vadd.f32 %v268, %v269
        %v271 = vrot.slane %v270, 1
        %v272 = vadd.f32 %v270, %v271
        %v273 = vrot.slane %v266, 4
        %v274 = vadd.f32 %v266, %v273
        %v275 = vrot.slane %v274, 2
        %v276 = vadd.f32 %v274, %v275
        %v277 = vrot.slane %v276, 1
        %v278 = vadd.f32 %v276, %v277
        %v279 = vlog2.pop %v272
        %v280 = vmul.f32 %v279, 0.6931472
        %v281 = vlog2.pop %v278
        %v282 = vmul.f32 %v281, 0.6931472
        %v283 = vadd.f32 %v254, %v280
        %v284 = vadd.f32 %v260, %v282
        %v285 = vlaneseq
        %v286 = vshrl.u32 %v285, 7
        %v287 = vlaneseq
        %v288 = vshrl.u32 %v287, 7
        %v289 = vsub.s32 0, %v288
        %v290 = vrot.slane %v248, %v289
        %v291 = vlaneseq
        %v292 = vshrl.u32 %v291, 7
        %v293 = vsub.s32 1, %v292
        %v294 = vrot.slane %v248, %v293
        %vm295 = vcmp.eq.s32.totalorder %v286, %v290
        %vm296 = vcmp.eq.s32.totalorder %v286, %v294
        %v297 = vsel %vm295, %v246, 0.0
        %v298 = vsel %vm296, %v247, 0.0
        %v299 = vrot.slane %v297, 4
        %v300 = vadd.f32 %v297, %v299
        %v301 = vrot.slane %v300, 2
        %v302 = vadd.f32 %v300, %v301
        %v303 = vrot.slane %v302, 1
        %v304 = vadd.f32 %v302, %v303
        %v305 = vrot.slane %v298, 4
        %v306 = vadd.f32 %v298, %v305
        %v307 = vrot.slane %v306, 2
        %v308 = vadd.f32 %v306, %v307
        %v309 = vrot.slane %v308, 1
        %v310 = vadd.f32 %v308, %v309
        %vm311 = vcmp.ne.s32.totalorder %v248, 255
        %v312 = vsub.f32 %v283, %v304
        %v313 = vsub.f32 %v284, %v310
        %v316 = vcombine.low %v312, %v313
        %v318 = vunpack.c.l.s4 1966171168
        %v319 = vunpack.c.0.s8 %v318
        %v320 = vlaneseq
        %v321 = vshrl.u32 %v320, 7
        %v322 = vsub.s32 %v319, %v321
        %v323 = vrot.slane %v316, %v322
        %v325 = vunpack.c.l.s4 1966171168
        %v326 = vunpack.c.0.s8 %v325
        %v327 = vlaneseq
        %v328 = vshrl.u32 %v327, 7
        %v329 = vsub.s32 %v326, %v328
        %v330 = vrot.slane %v323, %v329
        %v332 = vsel %vm311, %v330, 0.0
        %v333 = vld [vmem:[#allocation2] sm:$0x3]
        %v334 = vadd.f32 %v333, %v332
        %v335 = vlaneseq
        %vm336 = vcmp.ge.s32.totalorder %v335, 0
        %vm337 = vcmp.lt.s32.totalorder %v335, 256
        %vm338 = vmand %vm336, %vm337
        %339 = vst.msk [vmem:[#allocation2] sm:$0x3] %vm338, %v334
        // Predicated region
        $region41: #{tpu_custom_call.1} parent=27 // pred_check
          %p340 = pneg %p237
        $region42: #{tpu_custom_call.1} parent=27 // pred_check_branch
          %342 = sbr.rel (%p340) target = $region44
        $region43: #{tpu_custom_call.1} parent=27 // pred_region
          %v343 = vld [vmem:[#allocation2] sm:$0x3]
          %v345 = vlaneseq
          %v346 = vshrl.u32 %v345, 7
          %v347 = vsub.s32 0, %v346
          %v348 = vrot.slane %v343, %v347
          %v349 = vlaneseq
          %v350 = vshrl.u32 %v349, 7
          %v351 = vsub.s32 1, %v350
          %v352 = vrot.slane %v343, %v351
          %vm355 = vcmask 1040384
          %v356 = vsel %vm355, %v348, 0.0
          %v357 = vsel %vm355, %v352, 0.0
          %v358 = vadd.f32 %v356, %v357
          %359 = vadd.xlane.f32.xlu0 %v358
          %v360 = vpop.xlane.xlu0 %359
          %v361 = vlaneseq
          %v362 = vshrl.u32 %v361, 7
          %v363 = vsub.s32 0, %v362
          %v364 = vrot.slane %v360, %v363
          %365 = vst [vmem:[%s232] sm:$0xff] %v364
        $region44: #{tpu_custom_call.1} parent=27 // pred_fallthru
          _
        %s366 = sand.u32 %s111, 1
        %s367 = scalar_lea.sflag [#allocation5], %s366
        %s368 = sand.u32 %s111, 1
        %s369 = smul.addr %s368, 8
        %s370 = scalar_lea.vmem [#allocation8], %s369
        // Predicated region
        $region45: #{tpu_custom_call.1} parent=27 // pred_check
          %p371 = pneg %p121
        $region46: #{tpu_custom_call.1} parent=27 // pred_check_branch
          %373 = sbr.rel (%p371) target = $region48
        $region47: #{tpu_custom_call.1} parent=27 // pred_region
          %s375 = ssub.s32 128, 128
          %376 = vsyncadd %s367, %s375
          %s377 = sadd.s32 %s28, %s27
          %s378 = smul.addr %s377, 128
          %s379 = scalar_lea.hbm %s2, %s378
          %s381 = sshll.u32 %s370, 4
          %s382 = int_to_ptr.vmem [resolvable:$true] %s381
          %384 = dma.vmem_to_hbm [thread:$0]  %s382, 128, %s379, %s367
        $region48: #{tpu_custom_call.1} parent=27 // pred_fallthru
          _
      $region28: #{tpu_custom_call.1} parent=5 // pred_fallthru
        _
      %p385 = scmp.le.s32.totalorder 2, %s17
      // Predicated region
      $region49: #{tpu_custom_call.1} parent=5 // pred_check
        %p386 = pneg %p385
      $region50: #{tpu_custom_call.1} parent=5 // pred_check_branch
        %388 = sbr.rel (%p386) target = $region52
      $region51: #{tpu_custom_call.1} parent=5 // pred_region
        %s389 = ssub.s32 %s17, 2
        // Predicated region
        $region53: #{tpu_custom_call.1} parent=51 // pred_check
          %p390 = pneg %p127
        $region54: #{tpu_custom_call.1} parent=51 // pred_check_branch
          %392 = sbr.rel (%p390) target = $region56
        $region55: #{tpu_custom_call.1} parent=51 // pred_region
          %s393 = sand.u32 %s112, 1
          %s394 = scalar_lea.sflag [#allocation5], %s393
          %s395 = sand.u32 %s112, 1
          %s396 = smul.addr %s395, 8
          %s397 = scalar_lea.vmem [#allocation8], %s396
          %398 = dma.done %s394, 128
        $region56: #{tpu_custom_call.1} parent=51 // pred_fallthru
          _
      $region52: #{tpu_custom_call.1} parent=5 // pred_fallthru
        _
    $region6: #{tpu_custom_call.1} parent=1 // loop_footer
      %s21 = sadd.s32 1, %s17
    $region7: #{tpu_custom_call.1} parent=1 // loop_footer_branch
      %16 = sbr.rel target = $region3
    $region8: #{tpu_custom_call.1} parent=1 // loop_exit
      _
    %399 = vsyncpa [#allocation4], 1
    %s400 = scalar_lea.sflag [#allocation4], 1
    %401 = vsyncpa %s400, 1
    %402 = vsyncpa [#allocation7], 1
    %s403 = scalar_lea.sflag [#allocation7], 1
    %404 = vsyncpa %s403, 1
    %405 = vsyncpa [#allocation5], 1
    %s406 = scalar_lea.sflag [#allocation5], 1
    %407 = vsyncpa %s406, 1

</llo_original>
